<compile_context>
chip_gen: v5e
topology: v5e:2x2
jax: 0.10.0
libtpu: 0.0.40
codegen_flags: <defaults>
</compile_context>

<pallas_src>
import jax
import jax.numpy as jnp
from jax.experimental import pallas as pl
from jax.experimental.pallas import tpu as pltpu

NUM_AGENTS = 2
LANE = 128       # lane width (last-dim alignment)
SUBLANE_BF16 = 16


def _round_up(x, m):
    return (x + m - 1) // m * m


def critic_kernel(s_ref, a_ref, w1s_ref, w1a_ref, b1_ref,
                  w2_ref, b2_ref, w3_ref, b3_ref, o_ref):
    # fc1 applied to the state / action halves separately (fuses torch.cat).
    h1 = (jnp.dot(s_ref[...], w1s_ref[...], preferred_element_type=jnp.float32)
          + jnp.dot(a_ref[...], w1a_ref[...], preferred_element_type=jnp.float32)
          + b1_ref[...])
    h1 = jnp.maximum(h1, 0.0).astype(jnp.bfloat16)   # ReLU fused with downcast

    h2 = jnp.dot(h1, w2_ref[...], preferred_element_type=jnp.float32) + b2_ref[...]
    h2 = jnp.maximum(h2, 0.0).astype(jnp.bfloat16)

    # fc3 as W3_row · H2^T (MXU handles the transposed operand natively) so the
    # per-row Q values land lane-dense in a (1, tb) output row.
    q = jax.lax.dot_general(
        w3_ref[...], h2,
        dimension_numbers=(((1,), (1,)), ((), ())),
        preferred_element_type=jnp.float32)           # (8, tb); row 0 is real
    o_ref[...] = (q[:1, :] + b3_ref[...]).astype(o_ref.dtype)


def critic_forward(states, actions, params, *, block_b=512):
    """states: [B, state_dim*NUM_AGENTS], actions: [B, action_dim*NUM_AGENTS].

    Returns the Q-value, shape [B, 1] (float32).
    """
    w1s, w1a, b1 = params["fc1"]
    w2, b2 = params["fc2"]
    w3r, b3 = params["fc3"]

    B = states.shape[0]
    sd_p = w1s.shape[0]          # padded state-feature width
    ad_p = w1a.shape[0]          # padded action-feature width

    # Batch tile: multiple of 128 so the (1, tb) output block is lane-dense,
    # capped at block_b, and sized so large batches give >=2 grid steps
    # (both v7x TensorCores get work via the "parallel" axis).
    tb = min(block_b, max(LANE, _round_up(pl.cdiv(B, 2), LANE)))
    b_pad = _round_up(B, tb)

    # bf16 inputs (half the HBM read bytes); zero-pad feature dims up to the
    # padded weight row counts (padded weight rows are zero, numerics
    # unchanged) and the batch up to a tile multiple.
    s = jnp.pad(states.astype(jnp.bfloat16),
                ((0, b_pad - B), (0, sd_p - states.shape[1])))
    a = jnp.pad(actions.astype(jnp.bfloat16),
                ((0, b_pad - B), (0, ad_p - actions.shape[1])))

    resident = lambda arr: pl.BlockSpec(arr.shape, lambda i: (0,) * arr.ndim)

    out = pl.pallas_call(
        critic_kernel,
        out_shape=jax.ShapeDtypeStruct((1, b_pad), jnp.float32),
        grid=(b_pad // tb,),
        in_specs=[
            pl.BlockSpec((tb, sd_p), lambda i: (i, 0)),   # states: batch-tiled
            pl.BlockSpec((tb, ad_p), lambda i: (i, 0)),   # actions: batch-tiled
            resident(w1s), resident(w1a), resident(b1),   # weights: VMEM-resident
            resident(w2), resident(b2),
            resident(w3r), resident(b3),
        ],
        out_specs=pl.BlockSpec((1, tb), lambda i: (0, i)),
        compiler_params=pltpu.CompilerParams(
            dimension_semantics=("parallel",)),
    )(s, a, w1s, w1a, b1, w2, b2, w3r, b3)

    return out[0, :B].reshape(B, 1)


def init_critic_params(key, state_dim, action_dim, hidden_dim):
    """PyTorch nn.Linear default init (U[-1/sqrt(fan_in), 1/sqrt(fan_in)]).

    fc1 is stored split into state/action row blocks [in_pad, hid_pad] bf16,
    fc3 as a lane-dense row block [8, hid_pad] bf16 (row 0 real).  Biases are
    f32 rows.
    """
    sd2 = state_dim * NUM_AGENTS
    ad2 = action_dim * NUM_AGENTS
    in_dim = sd2 + ad2
    hid_p = _round_up(hidden_dim, LANE)
    sd_p = _round_up(sd2, SUBLANE_BF16)
    ad_p = _round_up(ad2, SUBLANE_BF16)

    def linear(k, fi, fo):
        kw, kb = jax.random.split(k)
        bound = 1.0 / (fi ** 0.5)
        w = jax.random.uniform(kw, (fi, fo), jnp.float32, -bound, bound)
        b = jax.random.uniform(kb, (fo,), jnp.float32, -bound, bound)
        return w, b

    k1, k2, k3 = jax.random.split(key, 3)
    w1, b1 = linear(k1, in_dim, hidden_dim)
    w2, b2 = linear(k2, hidden_dim, hidden_dim)
    w3, b3 = linear(k3, hidden_dim, 1)

    w1s = jnp.zeros((sd_p, hid_p), jnp.float32).at[:sd2, :hidden_dim].set(w1[:sd2])
    w1a = jnp.zeros((ad_p, hid_p), jnp.float32).at[:ad2, :hidden_dim].set(w1[sd2:])
    b1p = jnp.zeros((1, hid_p), jnp.float32).at[0, :hidden_dim].set(b1)

    w2p = jnp.zeros((hid_p, hid_p), jnp.float32).at[:hidden_dim, :hidden_dim].set(w2)
    b2p = jnp.zeros((1, hid_p), jnp.float32).at[0, :hidden_dim].set(b2)

    w3r = jnp.zeros((8, hid_p), jnp.float32).at[0, :hidden_dim].set(w3[:, 0])
    b3p = jnp.reshape(b3, (1, 1))

    return {
        "fc1": (w1s.astype(jnp.bfloat16), w1a.astype(jnp.bfloat16), b1p),
        "fc2": (w2p.astype(jnp.bfloat16), b2p),
        "fc3": (w3r.astype(jnp.bfloat16), b3p),
    }


def critic_ref(states, actions, params):
    """Pure-JAX reference using the same bf16-MXU / f32-accumulate math."""
    w1s, w1a, b1 = params["fc1"]
    w2, b2 = params["fc2"]
    w3r, b3 = params["fc3"]
    s = jnp.pad(states.astype(jnp.bfloat16),
                ((0, 0), (0, w1s.shape[0] - states.shape[1])))
    a = jnp.pad(actions.astype(jnp.bfloat16),
                ((0, 0), (0, w1a.shape[0] - actions.shape[1])))
    h1 = jnp.maximum(jnp.dot(s, w1s, preferred_element_type=jnp.float32)
                     + jnp.dot(a, w1a, preferred_element_type=jnp.float32)
                     + b1, 0.0)
    h2 = jnp.maximum(jnp.dot(h1.astype(jnp.bfloat16), w2,
                             preferred_element_type=jnp.float32) + b2, 0.0)
    q = jax.lax.dot_general(h2.astype(jnp.bfloat16), w3r,
                            dimension_numbers=(((1,), (1,)), ((), ())),
                            preferred_element_type=jnp.float32)[:, :1]
    return q + b3[0, 0]


if __name__ == "__main__":
    key = jax.random.PRNGKey(0)
    k_params, k_s, k_a = jax.random.split(key, 3)

    batch, state_dim, action_dim, hidden_dim = 2, 16, 8, 32
    params = init_critic_params(k_params, state_dim, action_dim, hidden_dim)
    states = jax.random.normal(k_s, (batch, state_dim * NUM_AGENTS), jnp.float32)
    actions = jax.random.normal(k_a, (batch, action_dim * NUM_AGENTS), jnp.float32)

    out = critic_forward(states, actions, params)
    jax.block_until_ready(out)

    ref = critic_ref(states, actions, params)
    assert out.shape == (batch, 1), out.shape
    assert jnp.allclose(out, ref, atol=1e-4, rtol=1e-4), "mismatch vs JAX reference"

    print("KERNEL_OK")
</pallas_src>

<mosaic_0001>
module attributes {stable_mosaic.version = 11 : i64} {
  func.func @critic_kernel(%arg0: i32, %arg1: memref<128x32xbf16, #tpu.memory_space<vmem>>, %arg2: memref<128x16xbf16, #tpu.memory_space<vmem>>, %arg3: memref<32x128xbf16, #tpu.memory_space<vmem>>, %arg4: memref<16x128xbf16, #tpu.memory_space<vmem>>, %arg5: memref<1x128xf32, #tpu.memory_space<vmem>>, %arg6: memref<128x128xbf16, #tpu.memory_space<vmem>>, %arg7: memref<1x128xf32, #tpu.memory_space<vmem>>, %arg8: memref<8x128xbf16, #tpu.memory_space<vmem>>, %arg9: memref<1x1xf32, #tpu.memory_space<vmem>>, %arg10: memref<1x128xf32, #tpu.memory_space<vmem>>) attributes {dimension_semantics = [#tpu.dimension_semantics<parallel>], iteration_bounds = array<i64: 1>, scalar_prefetch = 0 : i64, scratch_operands = 0 : i64, tpu.core_type = #tpu.core_type<tc>, window_params = [{transform_indices = @transform_0, window_bounds = array<i64: 128, 32>}, {transform_indices = @transform_1, window_bounds = array<i64: 128, 16>}, {pipeline_mode = #tpu.pipeline_mode<synchronous>, transform_indices = @transform_2, window_bounds = array<i64: 32, 128>}, {pipeline_mode = #tpu.pipeline_mode<synchronous>, transform_indices = @transform_3, window_bounds = array<i64: 16, 128>}, {pipeline_mode = #tpu.pipeline_mode<synchronous>, transform_indices = @transform_4, window_bounds = array<i64: 1, 128>}, {pipeline_mode = #tpu.pipeline_mode<synchronous>, transform_indices = @transform_5, window_bounds = array<i64: 128, 128>}, {pipeline_mode = #tpu.pipeline_mode<synchronous>, transform_indices = @transform_6, window_bounds = array<i64: 1, 128>}, {pipeline_mode = #tpu.pipeline_mode<synchronous>, transform_indices = @transform_7, window_bounds = array<i64: 8, 128>}, {pipeline_mode = #tpu.pipeline_mode<synchronous>, transform_indices = @transform_8, window_bounds = array<i64: 1, 1>}, {transform_indices = @transform_9, window_bounds = array<i64: 1, 128>}]} {
    %c0 = arith.constant 0 : index
    %c0_0 = arith.constant 0 : index
    %0 = vector.load %arg1[%c0, %c0_0] : memref<128x32xbf16, #tpu.memory_space<vmem>>, vector<128x32xbf16>
    %c0_1 = arith.constant 0 : index
    %c0_2 = arith.constant 0 : index
    %1 = vector.load %arg3[%c0_1, %c0_2] : memref<32x128xbf16, #tpu.memory_space<vmem>>, vector<32x128xbf16>
    %cst = arith.constant dense<0.000000e+00> : vector<128x128xf32>
    %2 = tpu.matmul %0, %1, %cst {dimension_numbers = #tpu.dot_dimension_numbers<[1], [0], [0], [1], [0, 0, 1, 1], [], []>} : vector<128x32xbf16>, vector<32x128xbf16>, vector<128x128xf32> -> vector<128x128xf32>
    %c0_3 = arith.constant 0 : index
    %c0_4 = arith.constant 0 : index
    %3 = vector.load %arg2[%c0_3, %c0_4] : memref<128x16xbf16, #tpu.memory_space<vmem>>, vector<128x16xbf16>
    %c0_5 = arith.constant 0 : index
    %c0_6 = arith.constant 0 : index
    %4 = vector.load %arg4[%c0_5, %c0_6] : memref<16x128xbf16, #tpu.memory_space<vmem>>, vector<16x128xbf16>
    %cst_7 = arith.constant dense<0.000000e+00> : vector<128x128xf32>
    %5 = tpu.matmul %3, %4, %cst_7 {dimension_numbers = #tpu.dot_dimension_numbers<[1], [0], [0], [1], [0, 0, 1, 1], [], []>} : vector<128x16xbf16>, vector<16x128xbf16>, vector<128x128xf32> -> vector<128x128xf32>
    %6 = arith.addf %2, %5 : vector<128x128xf32>
    %c0_8 = arith.constant 0 : index
    %c0_9 = arith.constant 0 : index
    %7 = vector.load %arg5[%c0_8, %c0_9] : memref<1x128xf32, #tpu.memory_space<vmem>>, vector<1x128xf32>
    %8 = vector.broadcast %7 : vector<1x128xf32> to vector<128x128xf32>
    %9 = arith.addf %6, %8 : vector<128x128xf32>
    %cst_10 = arith.constant 0.000000e+00 : f32
    %10 = vector.broadcast %cst_10 : f32 to vector<128x128xf32>
    %11 = arith.maximumf %9, %10 : vector<128x128xf32>
    %12 = arith.truncf %11 : vector<128x128xf32> to vector<128x128xbf16>
    %c0_11 = arith.constant 0 : index
    %c0_12 = arith.constant 0 : index
    %13 = vector.load %arg6[%c0_11, %c0_12] : memref<128x128xbf16, #tpu.memory_space<vmem>>, vector<128x128xbf16>
    %cst_13 = arith.constant dense<0.000000e+00> : vector<128x128xf32>
    %14 = tpu.matmul %12, %13, %cst_13 {dimension_numbers = #tpu.dot_dimension_numbers<[1], [0], [0], [1], [0, 0, 1, 1], [], []>} : vector<128x128xbf16>, vector<128x128xbf16>, vector<128x128xf32> -> vector<128x128xf32>
    %c0_14 = arith.constant 0 : index
    %c0_15 = arith.constant 0 : index
    %15 = vector.load %arg7[%c0_14, %c0_15] : memref<1x128xf32, #tpu.memory_space<vmem>>, vector<1x128xf32>
    %16 = vector.broadcast %15 : vector<1x128xf32> to vector<128x128xf32>
    %17 = arith.addf %14, %16 : vector<128x128xf32>
    %cst_16 = arith.constant 0.000000e+00 : f32
    %18 = vector.broadcast %cst_16 : f32 to vector<128x128xf32>
    %19 = arith.maximumf %17, %18 : vector<128x128xf32>
    %20 = arith.truncf %19 : vector<128x128xf32> to vector<128x128xbf16>
    %c0_17 = arith.constant 0 : index
    %c0_18 = arith.constant 0 : index
    %21 = vector.load %arg8[%c0_17, %c0_18] : memref<8x128xbf16, #tpu.memory_space<vmem>>, vector<8x128xbf16>
    %cst_19 = arith.constant dense<0.000000e+00> : vector<8x128xf32>
    %22 = tpu.matmul %21, %20, %cst_19 {dimension_numbers = #tpu.dot_dimension_numbers<[1], [1], [0], [0], [0, 0, 1, 0], [], []>} : vector<8x128xbf16>, vector<128x128xbf16>, vector<8x128xf32> -> vector<8x128xf32>
    %23 = vector.extract_strided_slice %22 {offsets = [0, 0], sizes = [1, 128], strides = [1, 1]} : vector<8x128xf32> to vector<1x128xf32>
    %c0_20 = arith.constant 0 : index
    %c0_21 = arith.constant 0 : index
    %24 = vector.load %arg9[%c0_20, %c0_21] : memref<1x1xf32, #tpu.memory_space<vmem>>, vector<1x1xf32>
    %25 = vector.broadcast %24 : vector<1x1xf32> to vector<1x128xf32>
    %26 = arith.addf %23, %25 : vector<1x128xf32>
    %c0_22 = arith.constant 0 : index
    %c0_23 = arith.constant 0 : index
    %27 = vector.load %arg10[%c0_22, %c0_23] : memref<1x128xf32, #tpu.memory_space<vmem>>, vector<1x128xf32>
    tpu.vector_store %arg10[%c0_22, %c0_23], %26 {strides = array<i32>} : memref<1x128xf32, #tpu.memory_space<vmem>>, vector<1x128xf32>,
    return
  }
  func.func @transform_0(%arg0: i32) -> (i32, i32) {
    %c0_i32 = arith.constant 0 : i32
    %c0_i32_0 = arith.constant 0 : i32
    return %arg0, %c0_i32 : i32, i32
  }
  func.func @transform_1(%arg0: i32) -> (i32, i32) {
    %c0_i32 = arith.constant 0 : i32
    %c0_i32_0 = arith.constant 0 : i32
    return %arg0, %c0_i32 : i32, i32
  }
  func.func @transform_2(%arg0: i32) -> (i32, i32) {
    %c0_i32 = arith.constant 0 : i32
    %c0_i32_0 = arith.constant 0 : i32
    %c0_i32_1 = arith.constant 0 : i32
    return %c0_i32, %c0_i32_0 : i32, i32
  }
  func.func @transform_3(%arg0: i32) -> (i32, i32) {
    %c0_i32 = arith.constant 0 : i32
    %c0_i32_0 = arith.constant 0 : i32
    %c0_i32_1 = arith.constant 0 : i32
    return %c0_i32, %c0_i32_0 : i32, i32
  }
  func.func @transform_4(%arg0: i32) -> (i32, i32) {
    %c0_i32 = arith.constant 0 : i32
    %c0_i32_0 = arith.constant 0 : i32
    %c0_i32_1 = arith.constant 0 : i32
    return %c0_i32, %c0_i32_0 : i32, i32
  }
  func.func @transform_5(%arg0: i32) -> (i32, i32) {
    %c0_i32 = arith.constant 0 : i32
    %c0_i32_0 = arith.constant 0 : i32
    %c0_i32_1 = arith.constant 0 : i32
    return %c0_i32, %c0_i32_0 : i32, i32
  }
  func.func @transform_6(%arg0: i32) -> (i32, i32) {
    %c0_i32 = arith.constant 0 : i32
    %c0_i32_0 = arith.constant 0 : i32
    %c0_i32_1 = arith.constant 0 : i32
    return %c0_i32, %c0_i32_0 : i32, i32
  }
  func.func @transform_7(%arg0: i32) -> (i32, i32) {
    %c0_i32 = arith.constant 0 : i32
    %c0_i32_0 = arith.constant 0 : i32
    %c0_i32_1 = arith.constant 0 : i32
    return %c0_i32, %c0_i32_0 : i32, i32
  }
  func.func @transform_8(%arg0: i32) -> (i32, i32) {
    %c0_i32 = arith.constant 0 : i32
    %c0_i32_0 = arith.constant 0 : i32
    %c0_i32_1 = arith.constant 0 : i32
    return %c0_i32, %c0_i32_0 : i32, i32
  }
  func.func @transform_9(%arg0: i32) -> (i32, i32) {
    %c0_i32 = arith.constant 0 : i32
    %c0_i32_0 = arith.constant 0 : i32
    return %c0_i32, %arg0 : i32, i32
  }
}

</mosaic_0001>

<llo_original>
// kernel: tpu_custom_call.1
$region0: #{tpu_custom_call.1}
  #allocation0 [shape = 'u32[]', space=smem, size = 0x4, offset = 0x4, fixed_abs, tag = 'smem constant byte address 0x4 - core index']
  #allocation1 [shape = 'u32[72,128]{1,0:T(1,128)}', space=vmem, size = 0x9000, scoped, tag = 'internal scratch']
  #allocation2 [shape = 'f32[1,1]{1,0:T(1,128)S(1)}', space=vmem, size = 0x200, scoped, tag = 'scoped memory for tpu_custom_call.1']
  %s0 = inlined_call_operand.vmem [shape: bf16[128,32], index: 0, kind: input, shape index: {}]
  %s1 = inlined_call_operand.vmem [shape: bf16[128,16], index: 1, kind: input, shape index: {}]
  %s2 = inlined_call_operand.vmem [shape: bf16[32,128], index: 2, kind: input, shape index: {}]
  %s3 = inlined_call_operand.vmem [shape: bf16[16,128], index: 3, kind: input, shape index: {}]
  %s4 = inlined_call_operand.vmem [shape: f32[1,128], index: 4, kind: input, shape index: {}]
  %s5 = inlined_call_operand.vmem [shape: bf16[128,128], index: 5, kind: input, shape index: {}]
  %s6 = inlined_call_operand.vmem [shape: f32[1,128], index: 6, kind: input, shape index: {}]
  %s7 = inlined_call_operand.vmem [shape: bf16[8,128], index: 7, kind: input, shape index: {}]
  %s8 = inlined_call_operand.<no memory space> [shape: f32[1,1], index: 8, kind: input, shape index: {}]
  %s9 = inlined_call_operand.hbm [shape: f32[1,128], index: 9, kind: output, shape index: {}]
  %s10 = sld [smem:[#allocation0]]
  $region46: #{tpu_custom_call.1} parent=0
    _
  %s12 = ssub.s32 1, %s10
  %s13 = scalar_select 0, %s12, %s10
  %v14 = vstv %s8
  %15 = vst [vmem:[#allocation2] sm:$0x1] %v14
  $region1: #{tpu_custom_call.1} parent=0
    #allocation3 [shape = 'u8[512]{0}', space=vmem, size = 0x400, scoped, tag = 'output window, operand 0, single buffered']
    #allocation4 [shape = 's32[1]{0}', space=sflag, size = 0x4, scoped, tag = 'scoped memory for tpu_custom_call.1']
    %16 = vsyncpa [#allocation4], 0
    // Predicated region
    $region2: #{tpu_custom_call.1} parent=1 // pred_check
      _
    $region3: #{tpu_custom_call.1} parent=1 // pred_check_branch
      %18 = sbr.rel (0) target = $region5
    $region4: #{tpu_custom_call.1} parent=1 // pred_region
      _
    $region5: #{tpu_custom_call.1} parent=1 // pred_fallthru
      _
    // Predicated region
    $region6: #{tpu_custom_call.1} parent=1 // pred_check
      _
    $region7: #{tpu_custom_call.1} parent=1 // pred_check_branch
      %20 = sbr.rel (0) target = $region9
    $region8: #{tpu_custom_call.1} parent=1 // pred_region
      _
    $region9: #{tpu_custom_call.1} parent=1 // pred_fallthru
      _
    // Predicated region
    $region10: #{tpu_custom_call.1} parent=1 // pred_check
      _
    $region11: #{tpu_custom_call.1} parent=1 // pred_check_branch
      %22 = sbr.rel (0) target = $region13
    $region12: #{tpu_custom_call.1} parent=1 // pred_region
      _
    $region13: #{tpu_custom_call.1} parent=1 // pred_fallthru
      _
    // Predicated region
    $region14: #{tpu_custom_call.1} parent=1 // pred_check
      _
    $region15: #{tpu_custom_call.1} parent=1 // pred_check_branch
      %24 = sbr.rel (0) target = $region17
    $region16: #{tpu_custom_call.1} parent=1 // pred_region
      _
    $region17: #{tpu_custom_call.1} parent=1 // pred_fallthru
      _
    // Predicated region
    $region18: #{tpu_custom_call.1} parent=1 // pred_check
      _
    $region19: #{tpu_custom_call.1} parent=1 // pred_check_branch
      %26 = sbr.rel (0) target = $region21
    $region20: #{tpu_custom_call.1} parent=1 // pred_region
      _
    $region21: #{tpu_custom_call.1} parent=1 // pred_fallthru
      _
    // Predicated region
    $region22: #{tpu_custom_call.1} parent=1 // pred_check
      _
    $region23: #{tpu_custom_call.1} parent=1 // pred_check_branch
      %28 = sbr.rel (0) target = $region25
    $region24: #{tpu_custom_call.1} parent=1 // pred_region
      _
    $region25: #{tpu_custom_call.1} parent=1 // pred_fallthru
      _
    // Predicated region
    $region26: #{tpu_custom_call.1} parent=1 // pred_check
      _
    $region27: #{tpu_custom_call.1} parent=1 // pred_check_branch
      %30 = sbr.rel (0) target = $region29
    $region28: #{tpu_custom_call.1} parent=1 // pred_region
      _
    $region29: #{tpu_custom_call.1} parent=1 // pred_fallthru
      _
    // Predicated region
    $region30: #{tpu_custom_call.1} parent=1 // pred_check
      _
    $region31: #{tpu_custom_call.1} parent=1 // pred_check_branch
      %32 = sbr.rel (0) target = $region33
    $region32: #{tpu_custom_call.1} parent=1 // pred_region
      _
    $region33: #{tpu_custom_call.1} parent=1 // pred_fallthru
      _
    // Predicated region
    $region34: #{tpu_custom_call.1} parent=1 // pred_check
      _
    $region35: #{tpu_custom_call.1} parent=1 // pred_check_branch
      %34 = sbr.rel (0) target = $region37
    $region36: #{tpu_custom_call.1} parent=1 // pred_region
      _
    $region37: #{tpu_custom_call.1} parent=1 // pred_fallthru
      _
    %v36 = vld [vmem:[%s0] sm:$0xf]
    %v37 = vld [vmem:[%s0 + $0x4] sm:$0xf]
    %v38 = vld [vmem:[%s0 + $0x8] sm:$0xf]
    %v39 = vld [vmem:[%s0 + $0xc] sm:$0xf]
    %v40 = vld [vmem:[%s0 + $0x10] sm:$0xf]
    %v41 = vld [vmem:[%s0 + $0x14] sm:$0xf]
    %v42 = vld [vmem:[%s0 + $0x18] sm:$0xf]
    %v43 = vld [vmem:[%s0 + $0x1c] sm:$0xf]
    %v44 = vld [vmem:[%s0 + $0x20] sm:$0xf]
    %v45 = vld [vmem:[%s0 + $0x24] sm:$0xf]
    %v46 = vld [vmem:[%s0 + $0x28] sm:$0xf]
    %v47 = vld [vmem:[%s0 + $0x2c] sm:$0xf]
    %v48 = vld [vmem:[%s0 + $0x30] sm:$0xf]
    %v49 = vld [vmem:[%s0 + $0x34] sm:$0xf]
    %v50 = vld [vmem:[%s0 + $0x38] sm:$0xf]
    %v51 = vld [vmem:[%s0 + $0x3c] sm:$0xf]
    %v52 = vld [vmem:[%s2] sm:$0xf]
    %v53 = vld [vmem:[%s2 + $0x4] sm:$0xf]
    %v54 = vld [vmem:[%s2 + $0x8] sm:$0xf]
    %v55 = vld [vmem:[%s2 + $0xc] sm:$0xf]
    %v56 = vld [vmem:[%s1] sm:$0xf]
    %v57 = vld [vmem:[%s1 + $0x4] sm:$0xf]
    %v58 = vld [vmem:[%s1 + $0x8] sm:$0xf]
    %v59 = vld [vmem:[%s1 + $0xc] sm:$0xf]
    %v60 = vld [vmem:[%s1 + $0x10] sm:$0xf]
    %v61 = vld [vmem:[%s1 + $0x14] sm:$0xf]
    %v62 = vld [vmem:[%s1 + $0x18] sm:$0xf]
    %v63 = vld [vmem:[%s1 + $0x1c] sm:$0xf]
    %v64 = vld [vmem:[%s1 + $0x20] sm:$0xf]
    %v65 = vld [vmem:[%s1 + $0x24] sm:$0xf]
    %v66 = vld [vmem:[%s1 + $0x28] sm:$0xf]
    %v67 = vld [vmem:[%s1 + $0x2c] sm:$0xf]
    %v68 = vld [vmem:[%s1 + $0x30] sm:$0xf]
    %v69 = vld [vmem:[%s1 + $0x34] sm:$0xf]
    %v70 = vld [vmem:[%s1 + $0x38] sm:$0xf]
    %v71 = vld [vmem:[%s1 + $0x3c] sm:$0xf]
    %v72 = vld [vmem:[%s3] sm:$0xf]
    %v73 = vld [vmem:[%s3 + $0x4] sm:$0xf]
    %v90 = vunpack.c.l.b16 %v56
    %v91 = vunpack.c.l.b16 %v57
    %v92 = vunpack.c.l.b16 %v58
    %v93 = vunpack.c.l.b16 %v59
    %v94 = vunpack.c.l.b16 %v60
    %v95 = vunpack.c.l.b16 %v61
    %v96 = vunpack.c.l.b16 %v62
    %v97 = vunpack.c.l.b16 %v63
    %v98 = vunpack.c.l.b16 %v64
    %v99 = vunpack.c.l.b16 %v65
    %v100 = vunpack.c.l.b16 %v66
    %v101 = vunpack.c.l.b16 %v67
    %v102 = vunpack.c.l.b16 %v68
    %v103 = vunpack.c.l.b16 %v69
    %v104 = vunpack.c.l.b16 %v70
    %v105 = vunpack.c.l.b16 %v71
    %v106 = vpack.c.b16 %v91, %v90
    %v107 = vpack.c.b16 %v93, %v92
    %v108 = vpack.c.b16 %v95, %v94
    %v109 = vpack.c.b16 %v97, %v96
    %v110 = vpack.c.b16 %v99, %v98
    %v111 = vpack.c.b16 %v101, %v100
    %v112 = vpack.c.b16 %v103, %v102
    %v113 = vpack.c.b16 %v105, %v104
    %v116 = vunpack.c.l.b16 %v72
    %v117 = vunpack.c.l.b16 %v73
    %v118 = vpack.c.b16 %v117, %v116
    %vm120 = vcmask 130048
    %v122 = vsel %vm120, %v106, 0
    %v125 = vsel %vm120, %v107, 0
    %v128 = vsel %vm120, %v108, 0
    %v131 = vsel %vm120, %v109, 0
    %v134 = vsel %vm120, %v110, 0
    %v137 = vsel %vm120, %v111, 0
    %v140 = vsel %vm120, %v112, 0
    %v143 = vsel %vm120, %v113, 0
    %145 = vmatpush.bf16.msra.mxu0 0
    %146 = vmatpush.bf16.msra.mxu0 0
    %147 = vmatpush.bf16.msra.mxu0 0
    %148 = vmatpush.bf16.msra.mxu0 0
    %149 = vmatpush.bf16.msra.mxu0 0
    %150 = vmatpush.bf16.msra.mxu0 0
    %151 = vmatpush.bf16.msra.mxu0 0
    %152 = vmatpush.bf16.msra.mxu0 %v118
    %153 = vmatmul.bf16.gmra.mxu0 %v122
    %v154 = vpop.f32.mrf.mxu0
    %v155 = vadd.f32 0.0, %v154
    %v156 = vpop.f32.mrf.mxu0
    %v157 = vadd.f32 0.0, %v156
    %158 = vmatmul.bf16.gmra.mxu0 %v125
    %v159 = vpop.f32.mrf.mxu0
    %v160 = vadd.f32 0.0, %v159
    %v161 = vpop.f32.mrf.mxu0
    %v162 = vadd.f32 0.0, %v161
    %163 = vmatmul.bf16.gmra.mxu0 %v128
    %v164 = vpop.f32.mrf.mxu0
    %v165 = vadd.f32 0.0, %v164
    %v166 = vpop.f32.mrf.mxu0
    %v167 = vadd.f32 0.0, %v166
    %168 = vmatmul.bf16.gmra.mxu0 %v131
    %v169 = vpop.f32.mrf.mxu0
    %v170 = vadd.f32 0.0, %v169
    %v171 = vpop.f32.mrf.mxu0
    %v172 = vadd.f32 0.0, %v171
    %173 = vmatmul.bf16.gmra.mxu0 %v134
    %v174 = vpop.f32.mrf.mxu0
    %v175 = vadd.f32 0.0, %v174
    %v176 = vpop.f32.mrf.mxu0
    %v177 = vadd.f32 0.0, %v176
    %178 = vmatmul.bf16.gmra.mxu0 %v137
    %v179 = vpop.f32.mrf.mxu0
    %v180 = vadd.f32 0.0, %v179
    %v181 = vpop.f32.mrf.mxu0
    %v182 = vadd.f32 0.0, %v181
    %183 = vmatmul.bf16.gmra.mxu0 %v140
    %v184 = vpop.f32.mrf.mxu0
    %v185 = vadd.f32 0.0, %v184
    %v186 = vpop.f32.mrf.mxu0
    %v187 = vadd.f32 0.0, %v186
    %188 = vmatmul.bf16.gmra.mxu0 %v143
    %v189 = vpop.f32.mrf.mxu0
    %v190 = vadd.f32 0.0, %v189
    %v191 = vpop.f32.mrf.mxu0
    %v192 = vadd.f32 0.0, %v191
    %193 = vdwg.mxu0
    %v210 = vunpack.c.l.b16 %v36
    %v211 = vunpack.c.l.b16 %v37
    %v212 = vunpack.c.l.b16 %v38
    %v213 = vunpack.c.l.b16 %v39
    %v214 = vunpack.c.l.b16 %v40
    %v215 = vunpack.c.l.b16 %v41
    %v216 = vunpack.c.l.b16 %v42
    %v217 = vunpack.c.l.b16 %v43
    %v218 = vunpack.c.l.b16 %v44
    %v219 = vunpack.c.l.b16 %v45
    %v220 = vunpack.c.l.b16 %v46
    %v221 = vunpack.c.l.b16 %v47
    %v222 = vunpack.c.l.b16 %v48
    %v223 = vunpack.c.l.b16 %v49
    %v224 = vunpack.c.l.b16 %v50
    %v225 = vunpack.c.l.b16 %v51
    %v226 = vpack.c.b16 %v211, %v210
    %v227 = vpack.c.b16 %v213, %v212
    %v228 = vpack.c.b16 %v215, %v214
    %v229 = vpack.c.b16 %v217, %v216
    %v230 = vpack.c.b16 %v219, %v218
    %v231 = vpack.c.b16 %v221, %v220
    %v232 = vpack.c.b16 %v223, %v222
    %v233 = vpack.c.b16 %v225, %v224
    %v238 = vunpack.c.l.b16 %v52
    %v239 = vunpack.c.l.b16 %v53
    %v240 = vunpack.c.l.b16 %v54
    %v241 = vunpack.c.l.b16 %v55
    %v242 = vpack.c.b16 %v239, %v238
    %v243 = vpack.c.b16 %v241, %v240
    %vm246 = vcmask 261120
    %v248 = vsel %vm246, %v226, 0
    %v251 = vsel %vm246, %v227, 0
    %v254 = vsel %vm246, %v228, 0
    %v257 = vsel %vm246, %v229, 0
    %v260 = vsel %vm246, %v230, 0
    %v263 = vsel %vm246, %v231, 0
    %v266 = vsel %vm246, %v232, 0
    %v269 = vsel %vm246, %v233, 0
    %271 = vmatpush.bf16.msra.mxu0 0
    %272 = vmatpush.bf16.msra.mxu0 0
    %273 = vmatpush.bf16.msra.mxu0 0
    %274 = vmatpush.bf16.msra.mxu0 0
    %275 = vmatpush.bf16.msra.mxu0 0
    %276 = vmatpush.bf16.msra.mxu0 0
    %277 = vmatpush.bf16.msra.mxu0 %v243
    %278 = vmatpush.bf16.msra.mxu0 %v242
    %279 = vmatmul.bf16.gmra.mxu0 %v248
    %v280 = vpop.f32.mrf.mxu0
    %v281 = vadd.f32 %v155, %v280
    %v282 = vpop.f32.mrf.mxu0
    %v283 = vadd.f32 %v157, %v282
    %284 = vmatmul.bf16.gmra.mxu0 %v251
    %v285 = vpop.f32.mrf.mxu0
    %v286 = vadd.f32 %v160, %v285
    %v287 = vpop.f32.mrf.mxu0
    %v288 = vadd.f32 %v162, %v287
    %289 = vmatmul.bf16.gmra.mxu0 %v254
    %v290 = vpop.f32.mrf.mxu0
    %v291 = vadd.f32 %v165, %v290
    %v292 = vpop.f32.mrf.mxu0
    %v293 = vadd.f32 %v167, %v292
    %294 = vmatmul.bf16.gmra.mxu0 %v257
    %v295 = vpop.f32.mrf.mxu0
    %v296 = vadd.f32 %v170, %v295
    %v297 = vpop.f32.mrf.mxu0
    %v298 = vadd.f32 %v172, %v297
    %299 = vmatmul.bf16.gmra.mxu0 %v260
    %v300 = vpop.f32.mrf.mxu0
    %v301 = vadd.f32 %v175, %v300
    %v302 = vpop.f32.mrf.mxu0
    %v303 = vadd.f32 %v177, %v302
    %304 = vmatmul.bf16.gmra.mxu0 %v263
    %v305 = vpop.f32.mrf.mxu0
    %v306 = vadd.f32 %v180, %v305
    %v307 = vpop.f32.mrf.mxu0
    %v308 = vadd.f32 %v182, %v307
    %309 = vmatmul.bf16.gmra.mxu0 %v266
    %v310 = vpop.f32.mrf.mxu0
    %v311 = vadd.f32 %v185, %v310
    %v312 = vpop.f32.mrf.mxu0
    %v313 = vadd.f32 %v187, %v312
    %314 = vmatmul.bf16.gmra.mxu0 %v269
    %v315 = vpop.f32.mrf.mxu0
    %v316 = vadd.f32 %v190, %v315
    %v317 = vpop.f32.mrf.mxu0
    %v318 = vadd.f32 %v192, %v317
    %319 = vdwg.mxu0
    %v320 = vld [vmem:[%s4] sm:$0x1]
    %v322 = vperm.slane %v320, 0
    %v324 = vadd.f32 %v281, %v322
    %v325 = vadd.f32 %v283, %v322
    %v326 = vadd.f32 %v286, %v322
    %v327 = vadd.f32 %v288, %v322
    %v328 = vadd.f32 %v291, %v322
    %v329 = vadd.f32 %v293, %v322
    %v330 = vadd.f32 %v296, %v322
    %v331 = vadd.f32 %v298, %v322
    %v332 = vadd.f32 %v301, %v322
    %v333 = vadd.f32 %v303, %v322
    %v334 = vadd.f32 %v306, %v322
    %v335 = vadd.f32 %v308, %v322
    %v336 = vadd.f32 %v311, %v322
    %v337 = vadd.f32 %v313, %v322
    %v338 = vadd.f32 %v316, %v322
    %v339 = vadd.f32 %v318, %v322
    %v340 = vmax.f32 %v324, 0.0
    %v341 = vmax.f32 %v325, 0.0
    %v342 = vmax.f32 %v326, 0.0
    %v343 = vmax.f32 %v327, 0.0
    %v344 = vmax.f32 %v328, 0.0
    %v345 = vmax.f32 %v329, 0.0
    %v346 = vmax.f32 %v330, 0.0
    %v347 = vmax.f32 %v331, 0.0
    %v348 = vmax.f32 %v332, 0.0
    %v349 = vmax.f32 %v333, 0.0
    %v350 = vmax.f32 %v334, 0.0
    %v351 = vmax.f32 %v335, 0.0
    %v352 = vmax.f32 %v336, 0.0
    %v353 = vmax.f32 %v337, 0.0
    %v354 = vmax.f32 %v338, 0.0
    %v355 = vmax.f32 %v339, 0.0
    %v356 = vpack.c.bf16 %v341, %v340
    %v357 = vpack.c.bf16 %v343, %v342
    %v358 = vpack.c.bf16 %v345, %v344
    %v359 = vpack.c.bf16 %v347, %v346
    %v360 = vpack.c.bf16 %v349, %v348
    %v361 = vpack.c.bf16 %v351, %v350
    %v362 = vpack.c.bf16 %v353, %v352
    %v363 = vpack.c.bf16 %v355, %v354
    %v364 = vld [vmem:[%s5] sm:$0xf]
    %v365 = vld [vmem:[%s5 + $0x4] sm:$0xf]
    %v366 = vld [vmem:[%s5 + $0x8] sm:$0xf]
    %v367 = vld [vmem:[%s5 + $0xc] sm:$0xf]
    %v368 = vld [vmem:[%s5 + $0x10] sm:$0xf]
    %v369 = vld [vmem:[%s5 + $0x14] sm:$0xf]
    %v370 = vld [vmem:[%s5 + $0x18] sm:$0xf]
    %v371 = vld [vmem:[%s5 + $0x1c] sm:$0xf]
    %v372 = vld [vmem:[%s5 + $0x20] sm:$0xf]
    %v373 = vld [vmem:[%s5 + $0x24] sm:$0xf]
    %v374 = vld [vmem:[%s5 + $0x28] sm:$0xf]
    %v375 = vld [vmem:[%s5 + $0x2c] sm:$0xf]
    %v376 = vld [vmem:[%s5 + $0x30] sm:$0xf]
    %v377 = vld [vmem:[%s5 + $0x34] sm:$0xf]
    %v378 = vld [vmem:[%s5 + $0x38] sm:$0xf]
    %v379 = vld [vmem:[%s5 + $0x3c] sm:$0xf]
    %v380 = vld [vmem:[%s6] sm:$0x1]
    %v382 = vperm.slane %v380, 0
    %v400 = vunpack.c.l.b16 %v364
    %v401 = vunpack.c.l.b16 %v365
    %v402 = vunpack.c.l.b16 %v366
    %v403 = vunpack.c.l.b16 %v367
    %v404 = vunpack.c.l.b16 %v368
    %v405 = vunpack.c.l.b16 %v369
    %v406 = vunpack.c.l.b16 %v370
    %v407 = vunpack.c.l.b16 %v371
    %v408 = vunpack.c.l.b16 %v372
    %v409 = vunpack.c.l.b16 %v373
    %v410 = vunpack.c.l.b16 %v374
    %v411 = vunpack.c.l.b16 %v375
    %v412 = vunpack.c.l.b16 %v376
    %v413 = vunpack.c.l.b16 %v377
    %v414 = vunpack.c.l.b16 %v378
    %v415 = vunpack.c.l.b16 %v379
    %v416 = vpack.c.b16 %v401, %v400
    %v417 = vpack.c.b16 %v403, %v402
    %v418 = vpack.c.b16 %v405, %v404
    %v419 = vpack.c.b16 %v407, %v406
    %v420 = vpack.c.b16 %v409, %v408
    %v421 = vpack.c.b16 %v411, %v410
    %v422 = vpack.c.b16 %v413, %v412
    %v423 = vpack.c.b16 %v415, %v414
    %432 = vmatpush.bf16.msra.mxu0 %v423
    %433 = vmatpush.bf16.msra.mxu0 %v422
    %434 = vmatpush.bf16.msra.mxu0 %v421
    %435 = vmatpush.bf16.msra.mxu0 %v420
    %436 = vmatpush.bf16.msra.mxu0 %v419
    %437 = vmatpush.bf16.msra.mxu0 %v418
    %438 = vmatpush.bf16.msra.mxu0 %v417
    %439 = vmatpush.bf16.msra.mxu0 %v416
    %440 = vmatmul.bf16.gmra.mxu0 %v356
    %v441 = vpop.f32.mrf.mxu0
    %v442 = vadd.f32 %v382, %v441
    %v443 = vpop.f32.mrf.mxu0
    %v444 = vadd.f32 %v382, %v443
    %445 = vmatmul.bf16.gmra.mxu0 %v357
    %v446 = vpop.f32.mrf.mxu0
    %v447 = vadd.f32 %v382, %v446
    %v448 = vpop.f32.mrf.mxu0
    %v449 = vadd.f32 %v382, %v448
    %450 = vmatmul.bf16.gmra.mxu0 %v358
    %v451 = vpop.f32.mrf.mxu0
    %v452 = vadd.f32 %v382, %v451
    %v453 = vpop.f32.mrf.mxu0
    %v454 = vadd.f32 %v382, %v453
    %455 = vmatmul.bf16.gmra.mxu0 %v359
    %v456 = vpop.f32.mrf.mxu0
    %v457 = vadd.f32 %v382, %v456
    %v458 = vpop.f32.mrf.mxu0
    %v459 = vadd.f32 %v382, %v458
    %460 = vmatmul.bf16.gmra.mxu0 %v360
    %v461 = vpop.f32.mrf.mxu0
    %v462 = vadd.f32 %v382, %v461
    %v463 = vpop.f32.mrf.mxu0
    %v464 = vadd.f32 %v382, %v463
    %465 = vmatmul.bf16.gmra.mxu0 %v361
    %v466 = vpop.f32.mrf.mxu0
    %v467 = vadd.f32 %v382, %v466
    %v468 = vpop.f32.mrf.mxu0
    %v469 = vadd.f32 %v382, %v468
    %470 = vmatmul.bf16.gmra.mxu0 %v362
    %v471 = vpop.f32.mrf.mxu0
    %v472 = vadd.f32 %v382, %v471
    %v473 = vpop.f32.mrf.mxu0
    %v474 = vadd.f32 %v382, %v473
    %475 = vmatmul.bf16.gmra.mxu0 %v363
    %v476 = vpop.f32.mrf.mxu0
    %v477 = vadd.f32 %v382, %v476
    %v478 = vpop.f32.mrf.mxu0
    %v479 = vadd.f32 %v382, %v478
    %480 = vdwg.mxu0
    %v481 = vmax.f32 %v442, 0.0
    %v482 = vmax.f32 %v444, 0.0
    %v483 = vmax.f32 %v447, 0.0
    %v484 = vmax.f32 %v449, 0.0
    %v485 = vmax.f32 %v452, 0.0
    %v486 = vmax.f32 %v454, 0.0
    %v487 = vmax.f32 %v457, 0.0
    %v488 = vmax.f32 %v459, 0.0
    %v489 = vmax.f32 %v462, 0.0
    %v490 = vmax.f32 %v464, 0.0
    %v491 = vmax.f32 %v467, 0.0
    %v492 = vmax.f32 %v469, 0.0
    %v493 = vmax.f32 %v472, 0.0
    %v494 = vmax.f32 %v474, 0.0
    %v495 = vmax.f32 %v477, 0.0
    %v496 = vmax.f32 %v479, 0.0
    %v497 = vpack.c.bf16 %v482, %v481
    %v498 = vpack.c.bf16 %v484, %v483
    %v499 = vpack.c.bf16 %v486, %v485
    %v500 = vpack.c.bf16 %v488, %v487
    %v501 = vpack.c.bf16 %v490, %v489
    %v502 = vpack.c.bf16 %v492, %v491
    %v503 = vpack.c.bf16 %v494, %v493
    %v504 = vpack.c.bf16 %v496, %v495
    %v505 = vld [vmem:[%s7] sm:$0xf]
    %506 = vmatpush.bf16.xpose.msra.mxu0 %v504
    %507 = vmatpush.bf16.xpose.msra.mxu0 %v503
    %508 = vmatpush.bf16.xpose.msra.mxu0 %v502
    %509 = vmatpush.bf16.xpose.msra.mxu0 %v501
    %510 = vmatpush.bf16.xpose.msra.mxu0 %v500
    %511 = vmatpush.bf16.xpose.msra.mxu0 %v499
    %512 = vmatpush.bf16.xpose.msra.mxu0 %v498
    %513 = vmatpush.bf16.xpose.msra.mxu0 %v497
    %514 = vmatmul.bf16.gmra.mxu0 %v505
    %v515 = vpop.f32.mrf.mxu0
    %v516 = vadd.f32 0.0, %v515
    %v517 = vpop.f32.mrf.mxu0
    %518 = vdwg.mxu0
    %v519 = vld [vmem:[#allocation2] sm:$0x1]
    %521 = vset.pattern.permute.xlu0 0
    %522 = vperm.xlu0 %521, %v519
    %v523 = vpop.permute.xlu0 %522
    %v525 = vperm.slane %v523, 0
    %v526 = vadd.f32 %v516, %v525
    %527 = vst [vmem:[#allocation3] sm:$0x1] %v526
    // Predicated region
    $region38: #{tpu_custom_call.1} parent=1 // pred_check
      _
    $region39: #{tpu_custom_call.1} parent=1 // pred_check_branch
      %529 = sbr.rel (0) target = $region41
    $region40: #{tpu_custom_call.1} parent=1 // pred_region
      %531 = vsyncadd [#allocation4], 0
      %s533 = sshll.u32 [#allocation3], 4
      %s534 = int_to_ptr.vmem [resolvable:$true] %s533
      %s535 = sshll.u32 %s9, 4
      %s536 = int_to_ptr.hbm [resolvable:$true] %s535
      %538 = dma.vmem_to_hbm [thread:$0]  %s534, 16, %s536, [#allocation4]
    $region41: #{tpu_custom_call.1} parent=1 // pred_fallthru
      _
    // Predicated region
    $region42: #{tpu_custom_call.1} parent=1 // pred_check
      _
    $region43: #{tpu_custom_call.1} parent=1 // pred_check_branch
      %540 = sbr.rel (0) target = $region45
    $region44: #{tpu_custom_call.1} parent=1 // pred_region
      %542 = dma.done [#allocation4], 16
    $region45: #{tpu_custom_call.1} parent=1 // pred_fallthru
      _
    %543 = vsyncpa [#allocation4], 1

</llo_original>
